<compile_context>
chip_gen: v6e
topology: v6e:2x2x1
jax: 0.10.0
libtpu: 0.0.40
codegen_flags: <defaults>
</compile_context>

<pallas_src>
import functools

import jax
import jax.numpy as jnp
from jax import lax
from jax.experimental import pallas as pl
from jax.experimental.pallas import tpu as pltpu

KSIZE = 7
PAD = 3                 # padding = 3 for kernel_size = 7 (as in the PyTorch module)
LANE_BLK_CAP = 2048     # max lanes (H*W elements) per reduction block


def _round_up(x, m):
    return ((x + m - 1) // m) * m


def _pick_batch(n, cap):
    """Largest divisor of n that is <= cap while keeping >= 2 grid steps."""
    if n <= 1 or cap < 2:
        return 1
    best = 1
    for d in range(2, min(cap, n // 2) + 1):
        if n % d == 0:
            best = d
    return best


# ----------------------------------------------------------------------------
# Stage 1: fused channel mean + max, lane-dense layout.
# ----------------------------------------------------------------------------
def _reduce_kernel(x_ref, o_ref, *, channels, sub_c, tail, single_step):
    # x_ref: (nb, ct, hw)  input tile (input dtype)
    # o_ref: (nb, 2, hw) f32 -- [:,0:1] running channel sum (-> mean), [:,1:2] max
    nb, ct, hw = x_ref.shape
    c_step = pl.program_id(2)
    c_base = c_step * ct

    def reduce_chunk(carry, chunk, c_off):
        s, m = carry
        chunk = chunk.astype(jnp.float32)
        if tail:
            cidx = c_off + lax.broadcasted_iota(jnp.int32, chunk.shape, 1)
            valid = cidx < channels
            s = s + jnp.sum(jnp.where(valid, chunk, 0.0), axis=1, keepdims=True)
            m = jnp.maximum(m, jnp.max(jnp.where(valid, chunk, -jnp.inf),
                                       axis=1, keepdims=True))
        else:
            s = s + jnp.sum(chunk, axis=1, keepdims=True)
            m = jnp.maximum(m, jnp.max(chunk, axis=1, keepdims=True))
        return s, m

    init = (jnp.zeros((nb, 1, hw), jnp.float32),
            jnp.full((nb, 1, hw), -jnp.inf, jnp.float32))

    n_full = ct // sub_c
    rem = ct - n_full * sub_c

    if n_full > 1:
        # sub_c == 8 here, so dynamic sublane starts are tile-aligned.
        def body(i, carry):
            start = pl.multiple_of(i * sub_c, sub_c)
            return reduce_chunk(carry, x_ref[:, pl.ds(start, sub_c), :],
                                c_base + i * sub_c)
        s, m = lax.fori_loop(0, n_full, body, init, unroll=2)
    elif n_full == 1:
        s, m = reduce_chunk(init, x_ref[:, 0:sub_c, :], c_base)
    else:
        s, m = init

    if rem:
        s, m = reduce_chunk((s, m), x_ref[:, n_full * sub_c:ct, :],
                            c_base + n_full * sub_c)

    inv_c = 1.0 / float(channels)
    if single_step:
        o_ref[:, 0:1, :] = s * inv_c
        o_ref[:, 1:2, :] = m
    else:
        @pl.when(c_step == 0)
        def _init():
            o_ref[:, 0:1, :] = jnp.zeros((nb, 1, hw), jnp.float32)
            o_ref[:, 1:2, :] = jnp.full((nb, 1, hw), -jnp.inf, jnp.float32)

        o_ref[:, 0:1, :] = o_ref[:, 0:1, :] + s
        o_ref[:, 1:2, :] = jnp.maximum(o_ref[:, 1:2, :], m)

        @pl.when(c_step == pl.num_programs(2) - 1)
        def _final():
            o_ref[:, 0:1, :] = o_ref[:, 0:1, :] * inv_c


# ----------------------------------------------------------------------------
# Stage 2: 7x7 conv (2 -> 1 channels, pad 3, no bias) + sigmoid.
# ----------------------------------------------------------------------------
def _conv_kernel(w_ref, p_ref, o_ref, pad_ref):
    # w_ref  : SMEM (2*7*7,) f32 -- conv1.weight[0] flattened as (c, kh, kw)
    # p_ref  : VMEM (nbc, 2, H, W) f32 -- (avg, max) planes
    # o_ref  : VMEM (nbc, 1, H, W) out dtype
    # pad_ref: VMEM scratch (2, H + 2*PAD, W + 2*PAD) f32
    nbc, _, H, W = p_ref.shape
    hp, wp = H + 2 * PAD, W + 2 * PAD

    # Zero only the thin border strips; the interior is fully overwritten below.
    pad_ref[:, 0:PAD, :] = jnp.zeros((2, PAD, wp), jnp.float32)
    pad_ref[:, PAD + H:hp, :] = jnp.zeros((2, PAD, wp), jnp.float32)
    pad_ref[:, :, 0:PAD] = jnp.zeros((2, hp, PAD), jnp.float32)
    pad_ref[:, :, PAD + W:wp] = jnp.zeros((2, hp, PAD), jnp.float32)

    def conv_one(b):
        pad_ref[:, PAD:PAD + H, PAD:PAD + W] = p_ref[b]
        acc = jnp.zeros((H, W), jnp.float32)
        for ci in range(2):
            for kh in range(KSIZE):
                for kw in range(KSIZE):
                    wgt = w_ref[ci * KSIZE * KSIZE + kh * KSIZE + kw]
                    # Taps read directly from the padded VMEM scratch.
                    acc = acc + wgt * pad_ref[ci, kh:kh + H, kw:kw + W]
        o_ref[b, 0] = jax.nn.sigmoid(acc).astype(o_ref.dtype)

    if nbc == 1:
        conv_one(0)
    else:
        @pl.loop(0, nbc)
        def _(b):
            conv_one(b)


# ----------------------------------------------------------------------------
# Wrapper.
# ----------------------------------------------------------------------------
def spatial_attention(x, weight):
    """x: (N, C, H, W); weight: (1, 2, 7, 7) like nn.Conv2d(2, 1, 7, bias=False).weight."""
    N, C, H, W = x.shape
    HW = H * W
    itemsize = int(jnp.dtype(x.dtype).itemsize)
    w_flat = weight[0].reshape(-1).astype(jnp.float32)          # (2*7*7,)

    try:
        vmem_cap = int(pltpu.get_tpu_info().vmem_capacity_bytes)
    except Exception:
        vmem_cap = 64 << 20                                     # v7x-safe fallback

    # ---- lane-dense view of x for the reduction ------------------------------
    x2 = x.reshape(N, C, HW)

    # Spatial (lane) blocking: keep blocks <= LANE_BLK_CAP lanes so the 8-channel
    # reduction chunk stays <= ~64 KiB of vregs; multiple of 128 when split.
    if HW <= LANE_BLK_CAP:
        hw_blk, n_hw, hw_pad = HW, 1, _round_up(HW, 128)
    else:
        hw_blk, n_hw, hw_pad = LANE_BLK_CAP, pl.cdiv(HW, LANE_BLK_CAP), LANE_BLK_CAP

    sub_tile = max(8, 32 // itemsize)                 # sublane tile rows (f32:8, bf16:16)
    per_batch_bytes = _round_up(C, sub_tile) * hw_pad * itemsize

    # Batch several images per step only when planes are tiny (amortize the
    # ~0.35us/step overhead) while keeping >= 2 parallel steps.
    nb_cap = max(1, min(8, LANE_BLK_CAP // hw_pad))
    nb = _pick_batch(N, nb_cap) if (per_batch_bytes <= (1 << 20) and n_hw == 1) else 1

    # Channel tile from a tile-padded VMEM budget (double-buffered inputs).
    in_budget = max(4 << 20, min(16 << 20, (vmem_cap - (8 << 20)) // 4))
    ct_cap = max(1, in_budget // (nb * hw_pad * itemsize))
    if ct_cap >= C:
        ct = C
    else:
        ct = max(8, (ct_cap // 8) * 8)
    n_c = pl.cdiv(C, ct)
    tail = (C % ct) != 0
    sub_c = min(8, ct)

    in_block = nb * _round_up(ct, sub_tile) * hw_pad * itemsize
    out_block = nb * 8 * hw_pad * 4
    needed = 2 * in_block + 2 * out_block + (2 << 20)
    vmem_red = int(min(max(needed, 16 << 20), max(16 << 20, vmem_cap - (2 << 20))))

    red_cost = pl.CostEstimate(
        flops=int(2 * N * C * HW),
        transcendentals=0,
        bytes_accessed=int(N * C * HW * itemsize + N * 2 * HW * 4),
    )

    reduce_fn = functools.partial(_reduce_kernel, channels=C, sub_c=sub_c,
                                  tail=tail, single_step=(n_c == 1))

    avgmax = pl.pallas_call(
        reduce_fn,
        out_shape=jax.ShapeDtypeStruct((N, 2, HW), jnp.float32),
        grid_spec=pltpu.PrefetchScalarGridSpec(
            num_scalar_prefetch=0,
            grid=(N // nb, n_hw, n_c),
            in_specs=[pl.BlockSpec((nb, ct, hw_blk), lambda n, h, c: (n, c, h))],
            out_specs=pl.BlockSpec((nb, 2, hw_blk), lambda n, h, c: (n, 0, h)),
        ),
        compiler_params=pltpu.CompilerParams(
            dimension_semantics=("parallel", "parallel", "arbitrary"),
            vmem_limit_bytes=vmem_red,
        ),
        cost_estimate=red_cost,
    )(x2)

    # ---- tiny per-image conv + sigmoid ---------------------------------------
    planes = avgmax.reshape(N, 2, H, W)               # free reshape (contiguous)

    Hp, Wp = _round_up(H, 8), _round_up(W, 128)
    nbc_cap = max(1, min(8, (8 << 20) // max(1, 2 * Hp * Wp * 4)))
    nbc = _pick_batch(N, nbc_cap)

    pad_bytes = 2 * _round_up(H + 2 * PAD, 8) * _round_up(W + 2 * PAD, 128) * 4
    conv_needed = (2 * nbc * 2 * Hp * Wp * 4 + 2 * nbc * Hp * Wp * itemsize
                   + pad_bytes + (2 << 20))
    vmem_conv = int(min(max(conv_needed, 16 << 20), max(16 << 20, vmem_cap - (2 << 20))))

    conv_cost = pl.CostEstimate(
        flops=int(2 * 2 * KSIZE * KSIZE * N * HW),
        transcendentals=int(N * HW),
        bytes_accessed=int(N * 2 * HW * 4 + N * HW * itemsize + 2 * KSIZE * KSIZE * 4),
    )

    out = pl.pallas_call(
        _conv_kernel,
        out_shape=jax.ShapeDtypeStruct((N, 1, H, W), x.dtype),
        grid_spec=pltpu.PrefetchScalarGridSpec(
            num_scalar_prefetch=0,
            grid=(N // nbc,),
            in_specs=[
                pl.BlockSpec((2 * KSIZE * KSIZE,), lambda n: (0,),
                             memory_space=pltpu.SMEM),
                pl.BlockSpec((nbc, 2, H, W), lambda n: (n, 0, 0, 0)),
            ],
            out_specs=pl.BlockSpec((nbc, 1, H, W), lambda n: (n, 0, 0, 0)),
            scratch_shapes=[pltpu.VMEM((2, H + 2 * PAD, W + 2 * PAD), jnp.float32)],
        ),
        compiler_params=pltpu.CompilerParams(
            dimension_semantics=("parallel",),
            vmem_limit_bytes=vmem_conv,
        ),
        cost_estimate=conv_cost,
    )(w_flat, planes)

    return out


def reference(x, weight):
    avg = jnp.mean(x, axis=1, keepdims=True)
    mx = jnp.max(x, axis=1, keepdims=True)
    xc = jnp.concatenate([avg, mx], axis=1)  # (N, 2, H, W)
    y = lax.conv_general_dilated(
        xc, weight, window_strides=(1, 1),
        padding=((PAD, PAD), (PAD, PAD)),
        dimension_numbers=("NCHW", "OIHW", "NCHW"))
    return jax.nn.sigmoid(y)


if __name__ == "__main__":
    key = jax.random.PRNGKey(0)
    kx, kw = jax.random.split(key)

    N, C, H, W = 2, 4, 16, 16
    x = jax.random.normal(kx, (N, C, H, W), dtype=jnp.float32)

    # Deterministic conv weight, same shape as nn.Conv2d(2, 1, 7, bias=False).weight
    fan_in = 2 * KSIZE * KSIZE
    bound = 1.0 / (fan_in ** 0.5)
    weight = jax.random.uniform(kw, (1, 2, KSIZE, KSIZE), jnp.float32, -bound, bound)

    out = spatial_attention(x, weight)
    out = jax.block_until_ready(out)

    ref = reference(x, weight)
    assert out.shape == (N, 1, H, W), out.shape
    assert jnp.allclose(out, ref, atol=1e-5, rtol=1e-5), float(jnp.max(jnp.abs(out - ref)))

    print("KERNEL_OK")
</pallas_src>

<mosaic_0001>
module attributes {stable_mosaic.version = 11 : i64} {
  func.func @_reduce_kernel(%arg0: i32, %arg1: i32, %arg2: i32, %arg3: memref<1x4x256xf32, #tpu.memory_space<vmem>>, %arg4: memref<1x2x256xf32, #tpu.memory_space<vmem>>) attributes {dimension_semantics = [#tpu.dimension_semantics<parallel>, #tpu.dimension_semantics<parallel>, #tpu.dimension_semantics<arbitrary>], iteration_bounds = array<i64: 2, 1, 1>, scalar_prefetch = 0 : i64, scratch_operands = 0 : i64, tpu.core_type = #tpu.core_type<tc>, window_params = [{transform_indices = @transform_0, window_bounds = array<i64: 1, 4, 256>}, {transform_indices = @transform_1, window_bounds = array<i64: 1, 2, 256>}]} {
    %cst = arith.constant 0.000000e+00 : f32
    %0 = vector.broadcast %cst : f32 to vector<1x1x256xf32>
    %cst_0 = arith.constant 0xFF800000 : f32
    %1 = vector.broadcast %cst_0 : f32 to vector<1x1x256xf32>
    %c0 = arith.constant 0 : index
    %c0_1 = arith.constant 0 : index
    %c0_2 = arith.constant 0 : index
    %2 = vector.load %arg3[%c0, %c0_1, %c0_2] : memref<1x4x256xf32, #tpu.memory_space<vmem>>, vector<1x4x256xf32>
    %cst_3 = arith.constant dense<0.000000e+00> : vector<1x256xf32>
    %3 = vector.multi_reduction <add>, %2, %cst_3 [1] : vector<1x4x256xf32> to vector<1x256xf32>
    %4 = vector.shape_cast %3 : vector<1x256xf32> to vector<1x1x256xf32>
    %5 = arith.addf %0, %4 : vector<1x1x256xf32>
    %cst_4 = arith.constant dense<0xFF800000> : vector<1x256xf32>
    %6 = vector.multi_reduction <maximumf>, %2, %cst_4 [1] : vector<1x4x256xf32> to vector<1x256xf32>
    %7 = vector.shape_cast %6 : vector<1x256xf32> to vector<1x1x256xf32>
    %8 = arith.maximumf %1, %7 : vector<1x1x256xf32>
    %cst_5 = arith.constant 2.500000e-01 : f32
    %9 = vector.broadcast %cst_5 : f32 to vector<1x1x256xf32>
    %10 = arith.mulf %5, %9 : vector<1x1x256xf32>
    %c0_6 = arith.constant 0 : index
    %c0_7 = arith.constant 0 : index
    %c0_8 = arith.constant 0 : index
    %11 = vector.load %arg4[%c0_6, %c0_7, %c0_8] : memref<1x2x256xf32, #tpu.memory_space<vmem>>, vector<1x1x256xf32>
    tpu.vector_store %arg4[%c0_6, %c0_7, %c0_8], %10 {strides = array<i32>} : memref<1x2x256xf32, #tpu.memory_space<vmem>>, vector<1x1x256xf32>,
    %c0_9 = arith.constant 0 : index
    %c1 = arith.constant 1 : index
    %c0_10 = arith.constant 0 : index
    %12 = vector.load %arg4[%c0_9, %c1, %c0_10] : memref<1x2x256xf32, #tpu.memory_space<vmem>>, vector<1x1x256xf32>
    tpu.vector_store %arg4[%c0_9, %c1, %c0_10], %8 {strides = array<i32>} : memref<1x2x256xf32, #tpu.memory_space<vmem>>, vector<1x1x256xf32>,
    return
  }
  func.func @transform_0(%arg0: i32, %arg1: i32, %arg2: i32) -> (i32, i32, i32) {
    %c0_i32 = arith.constant 0 : i32
    return %arg0, %arg2, %arg1 : i32, i32, i32
  }
  func.func @transform_1(%arg0: i32, %arg1: i32, %arg2: i32) -> (i32, i32, i32) {
    %c0_i32 = arith.constant 0 : i32
    %c0_i32_0 = arith.constant 0 : i32
    return %arg0, %c0_i32, %arg1 : i32, i32, i32
  }
}

</mosaic_0001>

<llo_original>
// kernel: tpu_custom_call.1
$region0: #{tpu_custom_call.1}
  #allocation0 [shape = 'u32[]', space=smem, size = 0x4, offset = 0x4, fixed_abs, tag = 'smem constant byte address 0x4 - core index']
  #allocation1 [shape = 'u32[144,128]{1,0:T(1,128)}', space=vmem, size = 0x12000, scoped, tag = 'internal scratch']
  %s0 = inlined_call_operand.hbm [shape: f32[2,4,256], index: 0, kind: input, shape index: {}]
  %s1 = inlined_call_operand.hbm [shape: f32[2,2,256], index: 1, kind: output, shape index: {}]
  %s2 = sld [smem:[#allocation0]]
  $region41: #{tpu_custom_call.1} parent=0
    _
  %s4 = ssub.s32 1, %s2
  %s5 = scalar_select 0, %s4, %s2
  $region1: #{tpu_custom_call.1} parent=0
    #allocation2 [shape = 'u8[8192]{0}', space=vmem, size = 0x2000, scoped, tag = 'input window, operand 0']
    #allocation3 [shape = 's32[2]{0}', space=sflag, size = 0x8, scoped, tag = 'scoped memory for tpu_custom_call.1']
    #allocation4 [shape = 's32[2]{0}', space=sflag, size = 0x8, scoped, tag = 'scoped memory for tpu_custom_call.1']
    #allocation5 [shape = 'u8[4096]{0}', space=vmem, size = 0x1000, scoped, tag = 'output window, operand 0']
    %6 = vsyncpa [#allocation3], 0
    %s7 = scalar_lea.sflag [#allocation3], 1
    %8 = vsyncpa %s7, 0
    %9 = vsyncpa [#allocation4], 0
    %s10 = scalar_lea.sflag [#allocation4], 1
    %11 = vsyncpa %s10, 0
    loop: start=0, step=1, limit=4
    $region2: #{tpu_custom_call.1} parent=1 // loop_pre_header
      _
    $region3: #{tpu_custom_call.1} parent=1 // loop_header
      %s13 = sphi 0, %s17
      %p14 = scmp.ge.s32.totalorder %s13, 4
      %s20 = sphi 0, %s39
      %s21 = sphi 0, %s35
      %s22 = sphi 0, %s31
      %s23 = sphi 0, %s20
      %s24 = sphi 0, %s21
      %s25 = sphi 0, %s22
      %s26 = sphi 0, %s23
      %s27 = sphi 0, %s24
      %s28 = sphi 0, %s25
      %s46 = sphi 0, %s48
      %s49 = sphi 0, %s46
      %s50 = sphi 0, %s49
      %s66 = sphi 0, %s50
      %s74 = sphi 0, %s76
      %s77 = sphi 0, %s74
      %s78 = sphi 0, %s77
      %s94 = sphi 0, %s78
    $region4: #{tpu_custom_call.1} parent=1 // loop_header_branch
      %16 = sbr.rel (%p14) target = $region8
    $region5: #{tpu_custom_call.1} parent=1 // loop_body
      %s18 = ssub.s32 %s13, 1
      %s19 = ssub.s32 %s13, 2
      %s29 = sadd.s32 1, %s22
      %p30 = scmp.ge.s32.totalorder %s29, 1
      %s31 = scalar_select %p30, 0, %s29
      %s32 = sadd.s32 1, %s21
      %s33 = scalar_select %p30, %s32, %s21
      %p34 = scmp.ge.s32.totalorder %s33, 1
      %s35 = scalar_select %p34, 0, %s33
      %s36 = sadd.s32 1, %s20
      %s37 = scalar_select %p34, %s36, %s20
      %p38 = scmp.ge.s32.totalorder %s37, 2
      %s39 = scalar_select %p38, 0, %s37
      %s40 = ssub.s32 %s20, %s39
      %s41 = ssub.s32 %s22, %s31
      %s42 = sor.u32 %s40, %s41
      %s43 = ssub.s32 %s21, %s35
      %s44 = sor.u32 %s42, %s43
      %p45 = scmp.eq.s32.totalorder %s44, 0
      %s47 = sadd.s32 %s46, 1
      %s48 = scalar_select %p45, %s46, %s47
      %p51 = pneg %p45
      %p52 = scmp.eq.s32.totalorder %s13, 1
      %p53 = por %p51, %p52
      %p54 = scmp.ne.s32.totalorder %s46, %s49
      %p55 = scmp.eq.s32.totalorder %s13, 0
      %p56 = por %p54, %p55
      %p57 = scmp.ne.s32.totalorder %s46, %s49
      %p58 = scmp.eq.s32.totalorder %s18, 1
      %p59 = por %p57, %p58
      %p60 = scmp.ne.s32.totalorder %s49, %s50
      %p61 = scmp.eq.s32.totalorder %s18, 0
      %p62 = por %p60, %p61
      %p63 = scmp.ne.s32.totalorder %s49, %s50
      %p64 = scmp.eq.s32.totalorder %s19, 1
      %p65 = por %p63, %p64
      %p67 = scmp.ne.s32.totalorder %s50, %s66
      %p68 = scmp.eq.s32.totalorder %s19, 0
      %p69 = por %p67, %p68
      %s70 = ssub.s32 %s20, %s39
      %s71 = ssub.s32 %s21, %s35
      %s72 = sor.u32 %s70, %s71
      %p73 = scmp.eq.s32.totalorder %s72, 0
      %s75 = sadd.s32 %s74, 1
      %s76 = scalar_select %p73, %s74, %s75
      %p79 = pneg %p73
      %p80 = scmp.eq.s32.totalorder %s13, 1
      %p81 = por %p79, %p80
      %p82 = scmp.ne.s32.totalorder %s74, %s77
      %p83 = scmp.eq.s32.totalorder %s13, 0
      %p84 = por %p82, %p83
      %p85 = scmp.ne.s32.totalorder %s74, %s77
      %p86 = scmp.eq.s32.totalorder %s18, 1
      %p87 = por %p85, %p86
      %p88 = scmp.ne.s32.totalorder %s77, %s78
      %p89 = scmp.eq.s32.totalorder %s18, 0
      %p90 = por %p88, %p89
      %p91 = scmp.ne.s32.totalorder %s77, %s78
      %p92 = scmp.eq.s32.totalorder %s19, 1
      %p93 = por %p91, %p92
      %p95 = scmp.ne.s32.totalorder %s78, %s94
      %p96 = scmp.eq.s32.totalorder %s19, 0
      %p97 = por %p95, %p96
      %p98 = scmp.le.s32.totalorder 1, %s13
      %p99 = scmp.lt.s32.totalorder %s13, 3
      %p100 = pnand %p98, %p99
      %p101 = pneg %p100
      // Predicated region
      $region9: #{tpu_custom_call.1} parent=5 // pred_check
        _
      $region10: #{tpu_custom_call.1} parent=5 // pred_check_branch
        %103 = sbr.rel (%p100) target = $region12
      $region11: #{tpu_custom_call.1} parent=5 // pred_region
        %s104 = ssub.s32 %s13, 1
      $region12: #{tpu_custom_call.1} parent=5 // pred_fallthru
        _
      %p105 = scmp.lt.s32.totalorder %s13, 2
      // Predicated region
      $region13: #{tpu_custom_call.1} parent=5 // pred_check
        %p106 = pneg %p105
      $region14: #{tpu_custom_call.1} parent=5 // pred_check_branch
        %108 = sbr.rel (%p106) target = $region16
      $region15: #{tpu_custom_call.1} parent=5 // pred_region
        // Predicated region
        $region17: #{tpu_custom_call.1} parent=15 // pred_check
          %p109 = pneg %p56
        $region18: #{tpu_custom_call.1} parent=15 // pred_check_branch
          %111 = sbr.rel (%p109) target = $region20
        $region19: #{tpu_custom_call.1} parent=15 // pred_region
          %s112 = sand.u32 %s46, 1
          %s113 = scalar_lea.sflag [#allocation3], %s112
          %s114 = sand.u32 %s46, 1
          %s115 = smul.addr %s114, 8
          %s116 = scalar_lea.vmem [#allocation2], %s115
          %s117 = smul.u32 2, %s21
          %s119 = ssub.s32 128, 128
          %120 = vsyncadd %s113, %s119
          %s121 = smul.addr %s22, 2
          %s122 = sadd.s32 %s117, %s121
          %s123 = smul.addr %s20, 2
          %s124 = sadd.s32 %s122, %s123
          %s125 = smul.addr %s124, 64
          %s126 = scalar_lea.hbm %s0, %s125
          %s128 = sshll.u32 %s116, 4
          %s129 = int_to_ptr.vmem [resolvable:$true] %s128
          %131 = dma.hbm_to_vmem [thread:$0]  %s126, 128, %s129, %s113
        $region20: #{tpu_custom_call.1} parent=15 // pred_fallthru
          _
      $region16: #{tpu_custom_call.1} parent=5 // pred_fallthru
        _
      %p132 = scmp.le.s32.totalorder 1, %s13
      %p133 = scmp.lt.s32.totalorder %s13, 3
      %p134 = pnand %p132, %p133
      %p135 = pneg %p134
      // Predicated region
      $region21: #{tpu_custom_call.1} parent=5 // pred_check
        _
      $region22: #{tpu_custom_call.1} parent=5 // pred_check_branch
        %137 = sbr.rel (%p134) target = $region24
      $region23: #{tpu_custom_call.1} parent=5 // pred_region
        %s138 = ssub.s32 %s13, 1
        %s139 = sand.u32 %s49, 1
        %s140 = scalar_lea.sflag [#allocation3], %s139
        %s141 = sand.u32 %s49, 1
        %s142 = smul.addr %s141, 8
        %s143 = scalar_lea.vmem [#allocation2], %s142
        // Predicated region
        $region25: #{tpu_custom_call.1} parent=23 // pred_check
          %p144 = pneg %p62
        $region26: #{tpu_custom_call.1} parent=23 // pred_check_branch
          %146 = sbr.rel (%p144) target = $region28
        $region27: #{tpu_custom_call.1} parent=23 // pred_region
          %147 = dma.done %s140, 128
        $region28: #{tpu_custom_call.1} parent=23 // pred_fallthru
          _
        %s148 = sand.u32 %s49, 1
        %s149 = scalar_lea.sflag [#allocation3], %s148
        %s150 = sand.u32 %s49, 1
        %s151 = smul.addr %s150, 8
        %s152 = scalar_lea.vmem [#allocation2], %s151
        %p153 = pneg %p62
        %p154 = pneg %p59
        %p155 = pneg %p90
        %p156 = pneg %p87
        %s157 = sand.u32 %s77, 1
        %s158 = scalar_lea.sflag [#allocation4], %s157
        %s159 = sand.u32 %s77, 1
        %s160 = smul.addr %s159, 4
        %s161 = scalar_lea.vmem [#allocation5], %s160
        %s162 = smul.u32 2, %s24
        %s163 = smul.u32 2, %s24
        %v164 = vld [vmem:[%s143] sm:$0xff]
        %v166 = vcombine.high %v164, %v164
        %vm168 = vcmask 1043456
        %v169 = vsel %vm168, %v164, 0.0
        %v170 = vrot.slane %v169, 4
        %v171 = vadd.f32 %v169, %v170
        %v172 = vrot.slane %v171, 2
        %v173 = vadd.f32 %v171, %v172
        %v174 = vrot.slane %v173, 1
        %v175 = vadd.f32 %v173, %v174
        %v176 = vsel %vm168, %v166, 0.0
        %v177 = vrot.slane %v176, 4
        %v178 = vadd.f32 %v176, %v177
        %v179 = vrot.slane %v178, 2
        %v180 = vadd.f32 %v178, %v179
        %v181 = vrot.slane %v180, 1
        %v182 = vadd.f32 %v180, %v181
        %v183 = vadd.f32 %v175, 0.0
        %v184 = vadd.f32 %v182, 0.0
        %v185 = vsel %vm168, %v164, -inf
        %v186 = vrot.slane %v185, 4
        %v187 = vmax.f32 %v185, %v186
        %v188 = vrot.slane %v187, 2
        %v189 = vmax.f32 %v187, %v188
        %v190 = vrot.slane %v189, 1
        %v191 = vmax.f32 %v189, %v190
        %v192 = vsel %vm168, %v166, -inf
        %v193 = vrot.slane %v192, 4
        %v194 = vmax.f32 %v192, %v193
        %v195 = vrot.slane %v194, 2
        %v196 = vmax.f32 %v194, %v195
        %v197 = vrot.slane %v196, 1
        %v198 = vmax.f32 %v196, %v197
        %v199 = vmul.f32 %v183, 0.25
        %v200 = vmul.f32 %v184, 0.25
        %v203 = vcombine.low %v199, %v200
        %v205 = vunpack.c.l.s4 1966171168
        %v206 = vunpack.c.0.s8 %v205
        %v207 = vlaneseq
        %v208 = vshrl.u32 %v207, 7
        %v209 = vsub.s32 %v206, %v208
        %v210 = vrot.slane %v203, %v209
        %v212 = vunpack.c.l.s4 1966171168
        %v213 = vunpack.c.0.s8 %v212
        %v214 = vlaneseq
        %v215 = vshrl.u32 %v214, 7
        %v216 = vsub.s32 %v213, %v215
        %v217 = vrot.slane %v210, %v216
        %v219 = vlaneseq
        %vm220 = vcmp.ge.s32.totalorder %v219, 0
        %vm221 = vcmp.lt.s32.totalorder %v219, 256
        %vm222 = vmand %vm220, %vm221
        %223 = vst.msk [vmem:[%s161] ss:$2 sm:$0x3] %vm222, %v217
        %v226 = vcombine.low %v191, %v198
        %v228 = vunpack.c.l.s4 1966171168
        %v229 = vunpack.c.0.s8 %v228
        %v230 = vlaneseq
        %v231 = vshrl.u32 %v230, 7
        %v232 = vsub.s32 %v229, %v231
        %v233 = vrot.slane %v226, %v232
        %v235 = vunpack.c.l.s4 1966171168
        %v236 = vunpack.c.0.s8 %v235
        %v237 = vlaneseq
        %v238 = vshrl.u32 %v237, 7
        %v239 = vsub.s32 %v236, %v238
        %v240 = vrot.slane %v233, %v239
        %s242 = scalar_lea.vmem %s161, 1 [#allocation5]
        %243 = vst.msk [vmem:[%s242] ss:$2 sm:$0x3] %vm222, %v240
        %s244 = sand.u32 %s77, 1
        %s245 = scalar_lea.sflag [#allocation4], %s244
        %s246 = sand.u32 %s77, 1
        %s247 = smul.addr %s246, 4
        %s248 = scalar_lea.vmem [#allocation5], %s247
        // Predicated region
        $region29: #{tpu_custom_call.1} parent=23 // pred_check
          %p249 = pneg %p87
        $region30: #{tpu_custom_call.1} parent=23 // pred_check_branch
          %251 = sbr.rel (%p249) target = $region32
        $region31: #{tpu_custom_call.1} parent=23 // pred_region
          %s252 = smul.u32 2, %s24
          %s254 = ssub.s32 64, 64
          %255 = vsyncadd %s245, %s254
          %s256 = smul.addr %s23, 2
          %s257 = sadd.s32 %s252, %s256
          %s258 = smul.addr %s257, 32
          %s259 = scalar_lea.hbm %s1, %s258
          %s261 = sshll.u32 %s248, 4
          %s262 = int_to_ptr.vmem [resolvable:$true] %s261
          %264 = dma.vmem_to_hbm [thread:$0]  %s262, 64, %s259, %s245
        $region32: #{tpu_custom_call.1} parent=23 // pred_fallthru
          _
      $region24: #{tpu_custom_call.1} parent=5 // pred_fallthru
        _
      %p265 = scmp.le.s32.totalorder 2, %s13
      // Predicated region
      $region33: #{tpu_custom_call.1} parent=5 // pred_check
        %p266 = pneg %p265
      $region34: #{tpu_custom_call.1} parent=5 // pred_check_branch
        %268 = sbr.rel (%p266) target = $region36
      $region35: #{tpu_custom_call.1} parent=5 // pred_region
        %s269 = ssub.s32 %s13, 2
        // Predicated region
        $region37: #{tpu_custom_call.1} parent=35 // pred_check
          %p270 = pneg %p93
        $region38: #{tpu_custom_call.1} parent=35 // pred_check_branch
          %272 = sbr.rel (%p270) target = $region40
        $region39: #{tpu_custom_call.1} parent=35 // pred_region
          %s273 = sand.u32 %s78, 1
          %s274 = scalar_lea.sflag [#allocation4], %s273
          %s275 = sand.u32 %s78, 1
          %s276 = smul.addr %s275, 4
          %s277 = scalar_lea.vmem [#allocation5], %s276
          %278 = dma.done %s274, 64
        $region40: #{tpu_custom_call.1} parent=35 // pred_fallthru
          _
      $region36: #{tpu_custom_call.1} parent=5 // pred_fallthru
        _
    $region6: #{tpu_custom_call.1} parent=1 // loop_footer
      %s17 = sadd.s32 1, %s13
    $region7: #{tpu_custom_call.1} parent=1 // loop_footer_branch
      %12 = sbr.rel target = $region3
    $region8: #{tpu_custom_call.1} parent=1 // loop_exit
      _
    %279 = vsyncpa [#allocation3], 1
    %s280 = scalar_lea.sflag [#allocation3], 1
    %281 = vsyncpa %s280, 1
    %282 = vsyncpa [#allocation4], 1
    %s283 = scalar_lea.sflag [#allocation4], 1
    %284 = vsyncpa %s283, 1

</llo_original>
